<compile_context>
chip_gen: v6e
topology: v6e:2x2x1
jax: 0.10.0
libtpu: 0.0.40
codegen_flags: <defaults>
</compile_context>

<pallas_src>
import functools

import jax
import jax.numpy as jnp
from jax import lax
from jax.experimental import pallas as pl
from jax.experimental.pallas import tpu as pltpu

GAMMA = 2.0          # exponent is 2 -> implemented as a squared multiply
ALPHA = 0.75
NUM_LABELS = 34

LANES = 128
SUBLANES = 8
WEIGHT_PERIOD_ROWS = 17            # lcm(34, 128) / 128
ROW_ALIGN = 136                    # lcm(17, 8): weight-period & sublane aligned
MAX_TILE_ROWS = 17 * 128           # 2176 rows -> ~1.1 MiB per f32 input tile


def _round_up(x, m):
    return ((x + m - 1) // m) * m


def _focal_loss_kernel(x_ref, t_ref, w_ref, o_ref, *, tile_rows, n_valid, n_total):
    pid = pl.program_id(0)

    x = x_ref[...].astype(jnp.float32)
    t = t_ref[...].astype(jnp.float32)
    w = w_ref[...]  # already f32, pre-scaled by ALPHA / (B * 34)

    # Numerically-stable binary_cross_entropy_with_logits (reduction='none'):
    #   bce = max(x, 0) - x*t + log1p(exp(-|x|))
    bce = jnp.maximum(x, 0.0) - x * t + jnp.log1p(jnp.exp(-jnp.abs(x)))
    pt = jnp.exp(-bce)

    # (1 - pt) ** 2 as a multiply (keeps the EUP at 3 transcendentals/element).
    om = 1.0 - pt
    contrib = om * om * bce * w

    # Mask padded tail elements (only ever present in the last tile).
    if n_valid < n_total:  # static
        row = lax.broadcasted_iota(jnp.int32, (tile_rows, LANES), 0)
        lane = lax.broadcasted_iota(jnp.int32, (tile_rows, LANES), 1)
        flat_idx = (pid * tile_rows + row) * LANES + lane
        contrib = jnp.where(flat_idx < n_valid, contrib, 0.0)

    # (tile_rows, 128) -> (8, 128) partial: whole-vreg VPU adds (no XLU,
    # no per-step scalar store).  Final reduction happens in JAX.
    partial = contrib.reshape(tile_rows // SUBLANES, SUBLANES, LANES).sum(axis=0)
    o_ref[...] = partial.reshape(1, SUBLANES, LANES)


def adaptive_focal_loss(inputs, targets, label_weights):
    """inputs, targets: (B, 34); label_weights: (34,). Returns scalar f32."""
    B, C = inputs.shape
    assert C == NUM_LABELS
    total = B * C

    # Lane-dense flattened layout, row count aligned to 136 (= lcm(17, 8)).
    n_rows = _round_up(pl.cdiv(total, LANES), ROW_ALIGN)
    if n_rows <= MAX_TILE_ROWS:
        tile_rows = n_rows
        grid_n = 1
    else:
        tile_rows = MAX_TILE_ROWS
        n_rows = _round_up(n_rows, tile_rows)
        grid_n = n_rows // tile_rows
    n_total = n_rows * LANES

    x_flat = inputs.reshape(-1)
    t_flat = targets.reshape(-1)
    pad = n_total - total
    if pad:
        x_flat = jnp.pad(x_flat, (0, pad))
        t_flat = jnp.pad(t_flat, (0, pad))
    x2 = x_flat.reshape(n_rows, LANES)
    t2 = t_flat.reshape(n_rows, LANES)

    # One resident weight tile: ALPHA and the 1/(B*34) mean factor folded in.
    # tile_rows*128 is a multiple of lcm(34,128), so the same tile is exact for
    # every grid step.
    w_scaled = label_weights.astype(jnp.float32) * jnp.float32(ALPHA / total)
    w_tile = jnp.tile(w_scaled, tile_rows * LANES // C).reshape(tile_rows, LANES)

    kernel = functools.partial(
        _focal_loss_kernel, tile_rows=tile_rows, n_valid=total, n_total=n_total
    )

    partials = pl.pallas_call(
        kernel,
        out_shape=jax.ShapeDtypeStruct((grid_n, SUBLANES, LANES), jnp.float32),
        grid=(grid_n,),
        in_specs=[
            pl.BlockSpec((tile_rows, LANES), lambda i: (i, 0)),
            pl.BlockSpec((tile_rows, LANES), lambda i: (i, 0)),
            pl.BlockSpec((tile_rows, LANES), lambda i: (0, 0)),  # resident weights
        ],
        out_specs=pl.BlockSpec((1, SUBLANES, LANES), lambda i: (i, 0, 0)),
        compiler_params=pltpu.CompilerParams(
            dimension_semantics=("parallel",),   # shards across TCs on v7x
            vmem_limit_bytes=32 * 1024 * 1024,   # portable incl. v7x (64 MiB phys)
        ),
    )(x2, t2, w_tile)

    return jnp.sum(partials)


def _reference(inputs, targets, label_weights):
    x = inputs.astype(jnp.float32)
    t = targets.astype(jnp.float32)
    bce = jnp.maximum(x, 0.0) - x * t + jnp.log1p(jnp.exp(-jnp.abs(x)))
    pt = jnp.exp(-bce)
    focal = ALPHA * (1.0 - pt) ** GAMMA * bce
    return jnp.mean(focal * label_weights[None, :].astype(jnp.float32))


if __name__ == "__main__":
    key = jax.random.PRNGKey(0)
    k1, k2, k3, k4 = jax.random.split(key, 4)

    # Small case (module-typical shapes).
    B = 2
    inputs = jax.random.normal(k1, (B, NUM_LABELS), dtype=jnp.float32)
    targets = (jax.random.uniform(k2, (B, NUM_LABELS)) > 0.5).astype(jnp.float32)
    label_weights = jnp.ones((NUM_LABELS,), dtype=jnp.float32)  # torch.ones(34) init

    loss = jax.block_until_ready(adaptive_focal_loss(inputs, targets, label_weights))
    ref = _reference(inputs, targets, label_weights)
    assert jnp.allclose(loss, ref, rtol=1e-5, atol=1e-6), (loss, ref)

    # Larger case: exercises multi-tile grid, tail masking, resident weight tile.
    B2 = 10000
    x_big = jax.random.normal(k3, (B2, NUM_LABELS), dtype=jnp.float32)
    t_big = (jax.random.uniform(k4, (B2, NUM_LABELS)) > 0.5).astype(jnp.float32)
    w_big = jax.random.uniform(jax.random.PRNGKey(1), (NUM_LABELS,),
                               dtype=jnp.float32) + 0.5
    loss_big = jax.block_until_ready(adaptive_focal_loss(x_big, t_big, w_big))
    ref_big = _reference(x_big, t_big, w_big)
    assert jnp.allclose(loss_big, ref_big, rtol=1e-4, atol=1e-6), (loss_big, ref_big)

    print("KERNEL_OK")
</pallas_src>

<mosaic_0001>
module attributes {stable_mosaic.version = 11 : i64} {
  func.func @_focal_loss_kernel(%arg0: i32, %arg1: memref<136x128xf32, #tpu.memory_space<vmem>>, %arg2: memref<136x128xf32, #tpu.memory_space<vmem>>, %arg3: memref<136x128xf32, #tpu.memory_space<vmem>>, %arg4: memref<1x8x128xf32, #tpu.memory_space<vmem>>) attributes {dimension_semantics = [#tpu.dimension_semantics<parallel>], iteration_bounds = array<i64: 1>, scalar_prefetch = 0 : i64, scratch_operands = 0 : i64, tpu.core_type = #tpu.core_type<tc>, window_params = [{transform_indices = @transform_0, window_bounds = array<i64: 136, 128>}, {transform_indices = @transform_1, window_bounds = array<i64: 136, 128>}, {pipeline_mode = #tpu.pipeline_mode<synchronous>, transform_indices = @transform_2, window_bounds = array<i64: 136, 128>}, {transform_indices = @transform_3, window_bounds = array<i64: 1, 8, 128>}]} {
    %c0 = arith.constant 0 : index
    %c0_0 = arith.constant 0 : index
    %0 = vector.load %arg1[%c0, %c0_0] : memref<136x128xf32, #tpu.memory_space<vmem>>, vector<136x128xf32>
    %c0_1 = arith.constant 0 : index
    %c0_2 = arith.constant 0 : index
    %1 = vector.load %arg2[%c0_1, %c0_2] : memref<136x128xf32, #tpu.memory_space<vmem>>, vector<136x128xf32>
    %c0_3 = arith.constant 0 : index
    %c0_4 = arith.constant 0 : index
    %2 = vector.load %arg3[%c0_3, %c0_4] : memref<136x128xf32, #tpu.memory_space<vmem>>, vector<136x128xf32>
    %cst = arith.constant 0.000000e+00 : f32
    %3 = vector.broadcast %cst : f32 to vector<136x128xf32>
    %4 = arith.maximumf %0, %3 : vector<136x128xf32>
    %5 = arith.mulf %0, %1 : vector<136x128xf32>
    %6 = arith.subf %4, %5 : vector<136x128xf32>
    %7 = math.absf %0 : vector<136x128xf32>
    %cst_5 = arith.constant 0.000000e+00 : f32
    %8 = vector.broadcast %cst_5 : f32 to vector<136x128xf32>
    %9 = arith.subf %8, %7 : vector<136x128xf32>
    %10 = math.exp %9 : vector<136x128xf32>
    %11 = math.log1p %10 : vector<136x128xf32>
    %12 = arith.addf %6, %11 : vector<136x128xf32>
    %cst_6 = arith.constant 0.000000e+00 : f32
    %13 = vector.broadcast %cst_6 : f32 to vector<136x128xf32>
    %14 = arith.subf %13, %12 : vector<136x128xf32>
    %15 = math.exp %14 : vector<136x128xf32>
    %cst_7 = arith.constant 1.000000e+00 : f32
    %16 = vector.broadcast %cst_7 : f32 to vector<136x128xf32>
    %17 = arith.subf %16, %15 : vector<136x128xf32>
    %18 = arith.mulf %17, %17 : vector<136x128xf32>
    %19 = arith.mulf %18, %12 : vector<136x128xf32>
    %20 = arith.mulf %19, %2 : vector<136x128xf32>
    %21 = tpu.iota {dimensions = array<i32: 0>} : vector<136x128xi32>
    %22 = tpu.iota {dimensions = array<i32: 1>} : vector<136x128xi32>
    %c136_i32 = arith.constant 136 : i32
    %23 = arith.muli %arg0, %c136_i32 : i32
    %24 = vector.broadcast %23 : i32 to vector<136x128xi32>
    %25 = arith.addi %24, %21 : vector<136x128xi32>
    %c128_i32 = arith.constant 128 : i32
    %26 = vector.broadcast %c128_i32 : i32 to vector<136x128xi32>
    %27 = arith.muli %25, %26 : vector<136x128xi32>
    %28 = arith.addi %27, %22 : vector<136x128xi32>
    %c68_i32 = arith.constant 68 : i32
    %29 = vector.broadcast %c68_i32 : i32 to vector<136x128xi32>
    %30 = arith.cmpi slt, %28, %29 : vector<136x128xi32>
    %cst_8 = arith.constant 0.000000e+00 : f32
    %31 = vector.broadcast %cst_8 : f32 to vector<136x128xf32>
    %32 = arith.select %30, %20, %31 : vector<136x128xi1>, vector<136x128xf32>
    %33 = vector.shape_cast %32 : vector<136x128xf32> to vector<17x8x128xf32>
    %cst_9 = arith.constant dense<0.000000e+00> : vector<8x128xf32>
    %34 = vector.multi_reduction <add>, %33, %cst_9 [0] : vector<17x8x128xf32> to vector<8x128xf32>
    %35 = vector.shape_cast %34 : vector<8x128xf32> to vector<1x8x128xf32>
    %c0_10 = arith.constant 0 : index
    %c0_11 = arith.constant 0 : index
    %c0_12 = arith.constant 0 : index
    %36 = vector.load %arg4[%c0_10, %c0_11, %c0_12] : memref<1x8x128xf32, #tpu.memory_space<vmem>>, vector<1x8x128xf32>
    tpu.vector_store %arg4[%c0_10, %c0_11, %c0_12], %35 {strides = array<i32>} : memref<1x8x128xf32, #tpu.memory_space<vmem>>, vector<1x8x128xf32>,
    return
  }
  func.func @transform_0(%arg0: i32) -> (i32, i32) {
    %c0_i32 = arith.constant 0 : i32
    %c0_i32_0 = arith.constant 0 : i32
    return %arg0, %c0_i32 : i32, i32
  }
  func.func @transform_1(%arg0: i32) -> (i32, i32) {
    %c0_i32 = arith.constant 0 : i32
    %c0_i32_0 = arith.constant 0 : i32
    return %arg0, %c0_i32 : i32, i32
  }
  func.func @transform_2(%arg0: i32) -> (i32, i32) {
    %c0_i32 = arith.constant 0 : i32
    %c0_i32_0 = arith.constant 0 : i32
    %c0_i32_1 = arith.constant 0 : i32
    return %c0_i32, %c0_i32_0 : i32, i32
  }
  func.func @transform_3(%arg0: i32) -> (i32, i32, i32) {
    %c0_i32 = arith.constant 0 : i32
    %c0_i32_0 = arith.constant 0 : i32
    %c0_i32_1 = arith.constant 0 : i32
    return %arg0, %c0_i32, %c0_i32_0 : i32, i32, i32
  }
}

</mosaic_0001>

<llo_original>
// kernel: tpu_custom_call.1
$region0: #{tpu_custom_call.1}
  #allocation0 [shape = 'u32[]', space=smem, size = 0x4, offset = 0x4, fixed_abs, tag = 'smem constant byte address 0x4 - core index']
  #allocation1 [shape = 'u32[144,128]{1,0:T(1,128)}', space=vmem, size = 0x12000, scoped, tag = 'internal scratch']
  %s0 = inlined_call_operand.hbm [shape: f32[136,128], index: 0, kind: input, shape index: {}]
  %s1 = inlined_call_operand.hbm [shape: f32[136,128], index: 1, kind: input, shape index: {}]
  %s2 = inlined_call_operand.hbm [shape: f32[136,128], index: 2, kind: input, shape index: {}]
  %s3 = inlined_call_operand.hbm [shape: f32[1,8,128], index: 3, kind: output, shape index: {}]
  %s4 = sld [smem:[#allocation0]]
  $region34: #{tpu_custom_call.1} parent=0
    _
  %s6 = ssub.s32 1, %s4
  %s7 = scalar_select 0, %s6, %s4
  $region1: #{tpu_custom_call.1} parent=0
    #allocation2 [shape = 'u8[69632]{0}', space=vmem, size = 0x11000, scoped, tag = 'input window, operand 0, single buffered']
    #allocation3 [shape = 's32[1]{0}', space=sflag, size = 0x4, scoped, tag = 'scoped memory for tpu_custom_call.1']
    #allocation4 [shape = 's32[1]{0}', space=sflag, size = 0x4, scoped, tag = 'scoped memory for tpu_custom_call.1']
    #allocation5 [shape = 'u8[69632]{0}', space=vmem, size = 0x11000, scoped, tag = 'input window, operand 1, single buffered']
    #allocation6 [shape = 's32[1]{0}', space=sflag, size = 0x4, scoped, tag = 'scoped memory for tpu_custom_call.1']
    #allocation7 [shape = 'u8[69632]{0}', space=vmem, size = 0x11000, scoped, tag = 'input window, operand 2, single buffered']
    #allocation8 [shape = 'u8[4096]{0}', space=vmem, size = 0x1000, scoped, tag = 'output window, operand 0, single buffered']
    %8 = vsyncpa [#allocation3], 0
    %9 = vsyncpa [#allocation6], 0
    %10 = vsyncpa [#allocation4], 0
    // Predicated region
    $region2: #{tpu_custom_call.1} parent=1 // pred_check
      _
    $region3: #{tpu_custom_call.1} parent=1 // pred_check_branch
      %12 = sbr.rel (0) target = $region5
    $region4: #{tpu_custom_call.1} parent=1 // pred_region
      %s14 = ssub.s32 2176, 2176
      %15 = vsyncadd [#allocation3], %s14
      %s16 = sshll.u32 [#allocation2], 4
      %s17 = int_to_ptr.vmem [resolvable:$true] %s16
      %22 = dma.hbm_to_vmem [thread:$0]  %s0, 2176, %s17, [#allocation3], 128, 128, 8
    $region5: #{tpu_custom_call.1} parent=1 // pred_fallthru
      _
    // Predicated region
    $region6: #{tpu_custom_call.1} parent=1 // pred_check
      _
    $region7: #{tpu_custom_call.1} parent=1 // pred_check_branch
      %24 = sbr.rel (0) target = $region9
    $region8: #{tpu_custom_call.1} parent=1 // pred_region
      %s26 = ssub.s32 2176, 2176
      %27 = vsyncadd [#allocation6], %s26
      %s28 = sshll.u32 [#allocation5], 4
      %s29 = int_to_ptr.vmem [resolvable:$true] %s28
      %34 = dma.hbm_to_vmem [thread:$0]  %s1, 2176, %s29, [#allocation6], 128, 128, 8
    $region9: #{tpu_custom_call.1} parent=1 // pred_fallthru
      _
    // Predicated region
    $region10: #{tpu_custom_call.1} parent=1 // pred_check
      _
    $region11: #{tpu_custom_call.1} parent=1 // pred_check_branch
      %36 = sbr.rel (0) target = $region13
    $region12: #{tpu_custom_call.1} parent=1 // pred_region
      %s38 = ssub.s32 2176, 2176
      %39 = vsyncadd [#allocation6], %s38
      %s40 = sshll.u32 [#allocation7], 4
      %s41 = int_to_ptr.vmem [resolvable:$true] %s40
      %46 = dma.hbm_to_vmem [thread:$0]  %s2, 2176, %s41, [#allocation6], 128, 128, 8
    $region13: #{tpu_custom_call.1} parent=1 // pred_fallthru
      _
    // Predicated region
    $region14: #{tpu_custom_call.1} parent=1 // pred_check
      _
    $region15: #{tpu_custom_call.1} parent=1 // pred_check_branch
      %48 = sbr.rel (0) target = $region17
    $region16: #{tpu_custom_call.1} parent=1 // pred_region
      %49 = dma.done [#allocation3], 2176
    $region17: #{tpu_custom_call.1} parent=1 // pred_fallthru
      _
    // Predicated region
    $region18: #{tpu_custom_call.1} parent=1 // pred_check
      _
    $region19: #{tpu_custom_call.1} parent=1 // pred_check_branch
      %51 = sbr.rel (0) target = $region21
    $region20: #{tpu_custom_call.1} parent=1 // pred_region
      %52 = dma.done [#allocation6], 2176
    $region21: #{tpu_custom_call.1} parent=1 // pred_fallthru
      _
    // Predicated region
    $region22: #{tpu_custom_call.1} parent=1 // pred_check
      _
    $region23: #{tpu_custom_call.1} parent=1 // pred_check_branch
      %54 = sbr.rel (0) target = $region25
    $region24: #{tpu_custom_call.1} parent=1 // pred_region
      %55 = dma.done [#allocation6], 2176
    $region25: #{tpu_custom_call.1} parent=1 // pred_fallthru
      _
    %v56 = vld [vmem:[#allocation2] sm:$0xff]
    %v57 = vld [vmem:[#allocation2 + $0x8] sm:$0xff]
    %v58 = vld [vmem:[#allocation2 + $0x10] sm:$0xff]
    %v59 = vld [vmem:[#allocation2 + $0x18] sm:$0xff]
    %v60 = vld [vmem:[#allocation2 + $0x20] sm:$0xff]
    %v61 = vld [vmem:[#allocation2 + $0x28] sm:$0xff]
    %v62 = vld [vmem:[#allocation2 + $0x30] sm:$0xff]
    %v63 = vld [vmem:[#allocation2 + $0x38] sm:$0xff]
    %v64 = vld [vmem:[#allocation2 + $0x40] sm:$0xff]
    %v65 = vld [vmem:[#allocation2 + $0x48] sm:$0xff]
    %v66 = vld [vmem:[#allocation2 + $0x50] sm:$0xff]
    %v67 = vld [vmem:[#allocation2 + $0x58] sm:$0xff]
    %v68 = vld [vmem:[#allocation2 + $0x60] sm:$0xff]
    %v69 = vld [vmem:[#allocation2 + $0x68] sm:$0xff]
    %v70 = vld [vmem:[#allocation2 + $0x70] sm:$0xff]
    %v71 = vld [vmem:[#allocation2 + $0x78] sm:$0xff]
    %v72 = vld [vmem:[#allocation2 + $0x80] sm:$0xff]
    %v73 = vld [vmem:[#allocation5] sm:$0xff]
    %v74 = vld [vmem:[#allocation5 + $0x8] sm:$0xff]
    %v75 = vld [vmem:[#allocation5 + $0x10] sm:$0xff]
    %v76 = vld [vmem:[#allocation5 + $0x18] sm:$0xff]
    %v77 = vld [vmem:[#allocation5 + $0x20] sm:$0xff]
    %v78 = vld [vmem:[#allocation5 + $0x28] sm:$0xff]
    %v79 = vld [vmem:[#allocation5 + $0x30] sm:$0xff]
    %v80 = vld [vmem:[#allocation5 + $0x38] sm:$0xff]
    %v81 = vld [vmem:[#allocation5 + $0x40] sm:$0xff]
    %v82 = vld [vmem:[#allocation5 + $0x48] sm:$0xff]
    %v83 = vld [vmem:[#allocation5 + $0x50] sm:$0xff]
    %v84 = vld [vmem:[#allocation5 + $0x58] sm:$0xff]
    %v85 = vld [vmem:[#allocation5 + $0x60] sm:$0xff]
    %v86 = vld [vmem:[#allocation5 + $0x68] sm:$0xff]
    %v87 = vld [vmem:[#allocation5 + $0x70] sm:$0xff]
    %v88 = vld [vmem:[#allocation5 + $0x78] sm:$0xff]
    %v89 = vld [vmem:[#allocation5 + $0x80] sm:$0xff]
    %v90 = vld [vmem:[#allocation7] sm:$0xff]
    %v91 = vld [vmem:[#allocation7 + $0x8] sm:$0xff]
    %v92 = vld [vmem:[#allocation7 + $0x10] sm:$0xff]
    %v93 = vld [vmem:[#allocation7 + $0x18] sm:$0xff]
    %v94 = vld [vmem:[#allocation7 + $0x20] sm:$0xff]
    %v95 = vld [vmem:[#allocation7 + $0x28] sm:$0xff]
    %v96 = vld [vmem:[#allocation7 + $0x30] sm:$0xff]
    %v97 = vld [vmem:[#allocation7 + $0x38] sm:$0xff]
    %v98 = vld [vmem:[#allocation7 + $0x40] sm:$0xff]
    %v99 = vld [vmem:[#allocation7 + $0x48] sm:$0xff]
    %v100 = vld [vmem:[#allocation7 + $0x50] sm:$0xff]
    %v101 = vld [vmem:[#allocation7 + $0x58] sm:$0xff]
    %v102 = vld [vmem:[#allocation7 + $0x60] sm:$0xff]
    %v103 = vld [vmem:[#allocation7 + $0x68] sm:$0xff]
    %v104 = vld [vmem:[#allocation7 + $0x70] sm:$0xff]
    %v105 = vld [vmem:[#allocation7 + $0x78] sm:$0xff]
    %v106 = vld [vmem:[#allocation7 + $0x80] sm:$0xff]
    %v107 = vmax.f32 %v56, 0.0
    %v108 = vmax.f32 %v57, 0.0
    %v109 = vmax.f32 %v58, 0.0
    %v110 = vmax.f32 %v59, 0.0
    %v111 = vmax.f32 %v60, 0.0
    %v112 = vmax.f32 %v61, 0.0
    %v113 = vmax.f32 %v62, 0.0
    %v114 = vmax.f32 %v63, 0.0
    %v115 = vmax.f32 %v64, 0.0
    %v116 = vmax.f32 %v65, 0.0
    %v117 = vmax.f32 %v66, 0.0
    %v118 = vmax.f32 %v67, 0.0
    %v119 = vmax.f32 %v68, 0.0
    %v120 = vmax.f32 %v69, 0.0
    %v121 = vmax.f32 %v70, 0.0
    %v122 = vmax.f32 %v71, 0.0
    %v123 = vmax.f32 %v72, 0.0
    %v124 = vmul.f32 %v56, %v73
    %v125 = vmul.f32 %v57, %v74
    %v126 = vmul.f32 %v58, %v75
    %v127 = vmul.f32 %v59, %v76
    %v128 = vmul.f32 %v60, %v77
    %v129 = vmul.f32 %v61, %v78
    %v130 = vmul.f32 %v62, %v79
    %v131 = vmul.f32 %v63, %v80
    %v132 = vmul.f32 %v64, %v81
    %v133 = vmul.f32 %v65, %v82
    %v134 = vmul.f32 %v66, %v83
    %v135 = vmul.f32 %v67, %v84
    %v136 = vmul.f32 %v68, %v85
    %v137 = vmul.f32 %v69, %v86
    %v138 = vmul.f32 %v70, %v87
    %v139 = vmul.f32 %v71, %v88
    %v140 = vmul.f32 %v72, %v89
    %v141 = vsub.f32 %v107, %v124
    %v142 = vsub.f32 %v108, %v125
    %v143 = vsub.f32 %v109, %v126
    %v144 = vsub.f32 %v110, %v127
    %v145 = vsub.f32 %v111, %v128
    %v146 = vsub.f32 %v112, %v129
    %v147 = vsub.f32 %v113, %v130
    %v148 = vsub.f32 %v114, %v131
    %v149 = vsub.f32 %v115, %v132
    %v150 = vsub.f32 %v116, %v133
    %v151 = vsub.f32 %v117, %v134
    %v152 = vsub.f32 %v118, %v135
    %v153 = vsub.f32 %v119, %v136
    %v154 = vsub.f32 %v120, %v137
    %v155 = vsub.f32 %v121, %v138
    %v156 = vsub.f32 %v122, %v139
    %v157 = vsub.f32 %v123, %v140
    %v158 = vand.u32 2147483647, %v56
    %v159 = vand.u32 2147483647, %v57
    %v160 = vand.u32 2147483647, %v58
    %v161 = vand.u32 2147483647, %v59
    %v162 = vand.u32 2147483647, %v60
    %v163 = vand.u32 2147483647, %v61
    %v164 = vand.u32 2147483647, %v62
    %v165 = vand.u32 2147483647, %v63
    %v166 = vand.u32 2147483647, %v64
    %v167 = vand.u32 2147483647, %v65
    %v168 = vand.u32 2147483647, %v66
    %v169 = vand.u32 2147483647, %v67
    %v170 = vand.u32 2147483647, %v68
    %v171 = vand.u32 2147483647, %v69
    %v172 = vand.u32 2147483647, %v70
    %v173 = vand.u32 2147483647, %v71
    %v174 = vand.u32 2147483647, %v72
    %v175 = vsub.f32 0.0, %v158
    %v176 = vsub.f32 0.0, %v159
    %v177 = vsub.f32 0.0, %v160
    %v178 = vsub.f32 0.0, %v161
    %v179 = vsub.f32 0.0, %v162
    %v180 = vsub.f32 0.0, %v163
    %v181 = vsub.f32 0.0, %v164
    %v182 = vsub.f32 0.0, %v165
    %v183 = vsub.f32 0.0, %v166
    %v184 = vsub.f32 0.0, %v167
    %v185 = vsub.f32 0.0, %v168
    %v186 = vsub.f32 0.0, %v169
    %v187 = vsub.f32 0.0, %v170
    %v188 = vsub.f32 0.0, %v171
    %v189 = vsub.f32 0.0, %v172
    %v190 = vsub.f32 0.0, %v173
    %v191 = vsub.f32 0.0, %v174
    %v192 = vmul.f32 %v175, 1.442695
    %v193 = vpow.pop %v192
    %v194 = vmul.f32 %v176, 1.442695
    %v195 = vpow.pop %v194
    %v196 = vmul.f32 %v177, 1.442695
    %v197 = vpow.pop %v196
    %v198 = vmul.f32 %v178, 1.442695
    %v199 = vpow.pop %v198
    %v200 = vmul.f32 %v179, 1.442695
    %v201 = vpow.pop %v200
    %v202 = vmul.f32 %v180, 1.442695
    %v203 = vpow.pop %v202
    %v204 = vmul.f32 %v181, 1.442695
    %v205 = vpow.pop %v204
    %v206 = vmul.f32 %v182, 1.442695
    %v207 = vpow.pop %v206
    %v208 = vmul.f32 %v183, 1.442695
    %v209 = vpow.pop %v208
    %v210 = vmul.f32 %v184, 1.442695
    %v211 = vpow.pop %v210
    %v212 = vmul.f32 %v185, 1.442695
    %v213 = vpow.pop %v212
    %v214 = vmul.f32 %v186, 1.442695
    %v215 = vpow.pop %v214
    %v216 = vmul.f32 %v187, 1.442695
    %v217 = vpow.pop %v216
    %v218 = vmul.f32 %v188, 1.442695
    %v219 = vpow.pop %v218
    %v220 = vmul.f32 %v189, 1.442695
    %v221 = vpow.pop %v220
    %v222 = vmul.f32 %v190, 1.442695
    %v223 = vpow.pop %v222
    %v224 = vmul.f32 %v191, 1.442695
    %v225 = vpow.pop %v224
    %v226 = vadd.f32 %v193, 1.0
    %v227 = vlog2.pop %v226
    %v228 = vmul.f32 %v227, 0.6931472
    %v229 = vmul.f32 -0.5, %v193
    %v230 = vadd.f32 %v229, 1.0
    %v231 = vmul.f32 %v230, %v193
    %v232 = vand.u32 2147483647, %v193
    %vm233 = vcmp.lt.f32.partialorder %v232, 0.0004427343
    %v234 = vsel %vm233, %v231, %v228
    %v235 = vadd.f32 %v195, 1.0
    %v236 = vlog2.pop %v235
    %v237 = vmul.f32 %v236, 0.6931472
    %v238 = vmul.f32 -0.5, %v195
    %v239 = vadd.f32 %v238, 1.0
    %v240 = vmul.f32 %v239, %v195
    %v241 = vand.u32 2147483647, %v195
    %vm242 = vcmp.lt.f32.partialorder %v241, 0.0004427343
    %v243 = vsel %vm242, %v240, %v237
    %v244 = vadd.f32 %v197, 1.0
    %v245 = vlog2.pop %v244
    %v246 = vmul.f32 %v245, 0.6931472
    %v247 = vmul.f32 -0.5, %v197
    %v248 = vadd.f32 %v247, 1.0
    %v249 = vmul.f32 %v248, %v197
    %v250 = vand.u32 2147483647, %v197
    %vm251 = vcmp.lt.f32.partialorder %v250, 0.0004427343
    %v252 = vsel %vm251, %v249, %v246
    %v253 = vadd.f32 %v199, 1.0
    %v254 = vlog2.pop %v253
    %v255 = vmul.f32 %v254, 0.6931472
    %v256 = vmul.f32 -0.5, %v199
    %v257 = vadd.f32 %v256, 1.0
    %v258 = vmul.f32 %v257, %v199
    %v259 = vand.u32 2147483647, %v199
    %vm260 = vcmp.lt.f32.partialorder %v259, 0.0004427343
    %v261 = vsel %vm260, %v258, %v255
    %v262 = vadd.f32 %v201, 1.0
    %v263 = vlog2.pop %v262
    %v264 = vmul.f32 %v263, 0.6931472
    %v265 = vmul.f32 -0.5, %v201
    %v266 = vadd.f32 %v265, 1.0
    %v267 = vmul.f32 %v266, %v201
    %v268 = vand.u32 2147483647, %v201
    %vm269 = vcmp.lt.f32.partialorder %v268, 0.0004427343
    %v270 = vsel %vm269, %v267, %v264
    %v271 = vadd.f32 %v203, 1.0
    %v272 = vlog2.pop %v271
    %v273 = vmul.f32 %v272, 0.6931472
    %v274 = vmul.f32 -0.5, %v203
    %v275 = vadd.f32 %v274, 1.0
    %v276 = vmul.f32 %v275, %v203
    %v277 = vand.u32 2147483647, %v203
    %vm278 = vcmp.lt.f32.partialorder %v277, 0.0004427343
    %v279 = vsel %vm278, %v276, %v273
    %v280 = vadd.f32 %v205, 1.0
    %v281 = vlog2.pop %v280
    %v282 = vmul.f32 %v281, 0.6931472
    %v283 = vmul.f32 -0.5, %v205
    %v284 = vadd.f32 %v283, 1.0
    %v285 = vmul.f32 %v284, %v205
    %v286 = vand.u32 2147483647, %v205
    %vm287 = vcmp.lt.f32.partialorder %v286, 0.0004427343
    %v288 = vsel %vm287, %v285, %v282
    %v289 = vadd.f32 %v207, 1.0
    %v290 = vlog2.pop %v289
    %v291 = vmul.f32 %v290, 0.6931472
    %v292 = vmul.f32 -0.5, %v207
    %v293 = vadd.f32 %v292, 1.0
    %v294 = vmul.f32 %v293, %v207
    %v295 = vand.u32 2147483647, %v207
    %vm296 = vcmp.lt.f32.partialorder %v295, 0.0004427343
    %v297 = vsel %vm296, %v294, %v291
    %v298 = vadd.f32 %v209, 1.0
    %v299 = vlog2.pop %v298
    %v300 = vmul.f32 %v299, 0.6931472
    %v301 = vmul.f32 -0.5, %v209
    %v302 = vadd.f32 %v301, 1.0
    %v303 = vmul.f32 %v302, %v209
    %v304 = vand.u32 2147483647, %v209
    %vm305 = vcmp.lt.f32.partialorder %v304, 0.0004427343
    %v306 = vsel %vm305, %v303, %v300
    %v307 = vadd.f32 %v211, 1.0
    %v308 = vlog2.pop %v307
    %v309 = vmul.f32 %v308, 0.6931472
    %v310 = vmul.f32 -0.5, %v211
    %v311 = vadd.f32 %v310, 1.0
    %v312 = vmul.f32 %v311, %v211
    %v313 = vand.u32 2147483647, %v211
    %vm314 = vcmp.lt.f32.partialorder %v313, 0.0004427343
    %v315 = vsel %vm314, %v312, %v309
    %v316 = vadd.f32 %v213, 1.0
    %v317 = vlog2.pop %v316
    %v318 = vmul.f32 %v317, 0.6931472
    %v319 = vmul.f32 -0.5, %v213
    %v320 = vadd.f32 %v319, 1.0
    %v321 = vmul.f32 %v320, %v213
    %v322 = vand.u32 2147483647, %v213
    %vm323 = vcmp.lt.f32.partialorder %v322, 0.0004427343
    %v324 = vsel %vm323, %v321, %v318
    %v325 = vadd.f32 %v215, 1.0
    %v326 = vlog2.pop %v325
    %v327 = vmul.f32 %v326, 0.6931472
    %v328 = vmul.f32 -0.5, %v215
    %v329 = vadd.f32 %v328, 1.0
    %v330 = vmul.f32 %v329, %v215
    %v331 = vand.u32 2147483647, %v215
    %vm332 = vcmp.lt.f32.partialorder %v331, 0.0004427343
    %v333 = vsel %vm332, %v330, %v327
    %v334 = vadd.f32 %v217, 1.0
    %v335 = vlog2.pop %v334
    %v336 = vmul.f32 %v335, 0.6931472
    %v337 = vmul.f32 -0.5, %v217
    %v338 = vadd.f32 %v337, 1.0
    %v339 = vmul.f32 %v338, %v217
    %v340 = vand.u32 2147483647, %v217
    %vm341 = vcmp.lt.f32.partialorder %v340, 0.0004427343
    %v342 = vsel %vm341, %v339, %v336
    %v343 = vadd.f32 %v219, 1.0
    %v344 = vlog2.pop %v343
    %v345 = vmul.f32 %v344, 0.6931472
    %v346 = vmul.f32 -0.5, %v219
    %v347 = vadd.f32 %v346, 1.0
    %v348 = vmul.f32 %v347, %v219
    %v349 = vand.u32 2147483647, %v219
    %vm350 = vcmp.lt.f32.partialorder %v349, 0.0004427343
    %v351 = vsel %vm350, %v348, %v345
    %v352 = vadd.f32 %v221, 1.0
    %v353 = vlog2.pop %v352
    %v354 = vmul.f32 %v353, 0.6931472
    %v355 = vmul.f32 -0.5, %v221
    %v356 = vadd.f32 %v355, 1.0
    %v357 = vmul.f32 %v356, %v221
    %v358 = vand.u32 2147483647, %v221
    %vm359 = vcmp.lt.f32.partialorder %v358, 0.0004427343
    %v360 = vsel %vm359, %v357, %v354
    %v361 = vadd.f32 %v223, 1.0
    %v362 = vlog2.pop %v361
    %v363 = vmul.f32 %v362, 0.6931472
    %v364 = vmul.f32 -0.5, %v223
    %v365 = vadd.f32 %v364, 1.0
    %v366 = vmul.f32 %v365, %v223
    %v367 = vand.u32 2147483647, %v223
    %vm368 = vcmp.lt.f32.partialorder %v367, 0.0004427343
    %v369 = vsel %vm368, %v366, %v363
    %v370 = vadd.f32 %v225, 1.0
    %v371 = vlog2.pop %v370
    %v372 = vmul.f32 %v371, 0.6931472
    %v373 = vmul.f32 -0.5, %v225
    %v374 = vadd.f32 %v373, 1.0
    %v375 = vmul.f32 %v374, %v225
    %v376 = vand.u32 2147483647, %v225
    %vm377 = vcmp.lt.f32.partialorder %v376, 0.0004427343
    %v378 = vsel %vm377, %v375, %v372
    %v379 = vadd.f32 %v141, %v234
    %v380 = vadd.f32 %v142, %v243
    %v381 = vadd.f32 %v143, %v252
    %v382 = vadd.f32 %v144, %v261
    %v383 = vadd.f32 %v145, %v270
    %v384 = vadd.f32 %v146, %v279
    %v385 = vadd.f32 %v147, %v288
    %v386 = vadd.f32 %v148, %v297
    %v387 = vadd.f32 %v149, %v306
    %v388 = vadd.f32 %v150, %v315
    %v389 = vadd.f32 %v151, %v324
    %v390 = vadd.f32 %v152, %v333
    %v391 = vadd.f32 %v153, %v342
    %v392 = vadd.f32 %v154, %v351
    %v393 = vadd.f32 %v155, %v360
    %v394 = vadd.f32 %v156, %v369
    %v395 = vadd.f32 %v157, %v378
    %v396 = vsub.f32 0.0, %v379
    %v397 = vsub.f32 0.0, %v380
    %v398 = vsub.f32 0.0, %v381
    %v399 = vsub.f32 0.0, %v382
    %v400 = vsub.f32 0.0, %v383
    %v401 = vsub.f32 0.0, %v384
    %v402 = vsub.f32 0.0, %v385
    %v403 = vsub.f32 0.0, %v386
    %v404 = vsub.f32 0.0, %v387
    %v405 = vsub.f32 0.0, %v388
    %v406 = vsub.f32 0.0, %v389
    %v407 = vsub.f32 0.0, %v390
    %v408 = vsub.f32 0.0, %v391
    %v409 = vsub.f32 0.0, %v392
    %v410 = vsub.f32 0.0, %v393
    %v411 = vsub.f32 0.0, %v394
    %v412 = vsub.f32 0.0, %v395
    %v413 = vmul.f32 %v396, 1.442695
    %v414 = vpow.pop %v413
    %v415 = vmul.f32 %v397, 1.442695
    %v416 = vpow.pop %v415
    %v417 = vmul.f32 %v398, 1.442695
    %v418 = vpow.pop %v417
    %v419 = vmul.f32 %v399, 1.442695
    %v420 = vpow.pop %v419
    %v421 = vmul.f32 %v400, 1.442695
    %v422 = vpow.pop %v421
    %v423 = vmul.f32 %v401, 1.442695
    %v424 = vpow.pop %v423
    %v425 = vmul.f32 %v402, 1.442695
    %v426 = vpow.pop %v425
    %v427 = vmul.f32 %v403, 1.442695
    %v428 = vpow.pop %v427
    %v429 = vmul.f32 %v404, 1.442695
    %v430 = vpow.pop %v429
    %v431 = vmul.f32 %v405, 1.442695
    %v432 = vpow.pop %v431
    %v433 = vmul.f32 %v406, 1.442695
    %v434 = vpow.pop %v433
    %v435 = vmul.f32 %v407, 1.442695
    %v436 = vpow.pop %v435
    %v437 = vmul.f32 %v408, 1.442695
    %v438 = vpow.pop %v437
    %v439 = vmul.f32 %v409, 1.442695
    %v440 = vpow.pop %v439
    %v441 = vmul.f32 %v410, 1.442695
    %v442 = vpow.pop %v441
    %v443 = vmul.f32 %v411, 1.442695
    %v444 = vpow.pop %v443
    %v445 = vmul.f32 %v412, 1.442695
    %v446 = vpow.pop %v445
    %v447 = vsub.f32 1.0, %v414
    %v448 = vsub.f32 1.0, %v416
    %v449 = vsub.f32 1.0, %v418
    %v450 = vsub.f32 1.0, %v420
    %v451 = vsub.f32 1.0, %v422
    %v452 = vsub.f32 1.0, %v424
    %v453 = vsub.f32 1.0, %v426
    %v454 = vsub.f32 1.0, %v428
    %v455 = vsub.f32 1.0, %v430
    %v456 = vsub.f32 1.0, %v432
    %v457 = vsub.f32 1.0, %v434
    %v458 = vsub.f32 1.0, %v436
    %v459 = vsub.f32 1.0, %v438
    %v460 = vsub.f32 1.0, %v440
    %v461 = vsub.f32 1.0, %v442
    %v462 = vsub.f32 1.0, %v444
    %v463 = vsub.f32 1.0, %v446
    %v464 = vmul.f32 %v447, %v447
    %v465 = vmul.f32 %v448, %v448
    %v466 = vmul.f32 %v449, %v449
    %v467 = vmul.f32 %v450, %v450
    %v468 = vmul.f32 %v451, %v451
    %v469 = vmul.f32 %v452, %v452
    %v470 = vmul.f32 %v453, %v453
    %v471 = vmul.f32 %v454, %v454
    %v472 = vmul.f32 %v455, %v455
    %v473 = vmul.f32 %v456, %v456
    %v474 = vmul.f32 %v457, %v457
    %v475 = vmul.f32 %v458, %v458
    %v476 = vmul.f32 %v459, %v459
    %v477 = vmul.f32 %v460, %v460
    %v478 = vmul.f32 %v461, %v461
    %v479 = vmul.f32 %v462, %v462
    %v480 = vmul.f32 %v463, %v463
    %v481 = vmul.f32 %v464, %v379
    %v482 = vmul.f32 %v465, %v380
    %v483 = vmul.f32 %v466, %v381
    %v484 = vmul.f32 %v467, %v382
    %v485 = vmul.f32 %v468, %v383
    %v486 = vmul.f32 %v469, %v384
    %v487 = vmul.f32 %v470, %v385
    %v488 = vmul.f32 %v471, %v386
    %v489 = vmul.f32 %v472, %v387
    %v490 = vmul.f32 %v473, %v388
    %v491 = vmul.f32 %v474, %v389
    %v492 = vmul.f32 %v475, %v390
    %v493 = vmul.f32 %v476, %v391
    %v494 = vmul.f32 %v477, %v392
    %v495 = vmul.f32 %v478, %v393
    %v496 = vmul.f32 %v479, %v394
    %v497 = vmul.f32 %v480, %v395
    %v498 = vmul.f32 %v481, %v90
    %v499 = vmul.f32 %v482, %v91
    %v500 = vmul.f32 %v483, %v92
    %v501 = vmul.f32 %v484, %v93
    %v502 = vmul.f32 %v485, %v94
    %v503 = vmul.f32 %v486, %v95
    %v504 = vmul.f32 %v487, %v96
    %v505 = vmul.f32 %v488, %v97
    %v506 = vmul.f32 %v489, %v98
    %v507 = vmul.f32 %v490, %v99
    %v508 = vmul.f32 %v491, %v100
    %v509 = vmul.f32 %v492, %v101
    %v510 = vmul.f32 %v493, %v102
    %v511 = vmul.f32 %v494, %v103
    %v512 = vmul.f32 %v495, %v104
    %v513 = vmul.f32 %v496, %v105
    %v514 = vmul.f32 %v497, %v106
    %v515 = vlaneseq
    %v516 = vshrl.u32 %v515, 7
    %v517 = vadd.s32 %v516, 8
    %v518 = vadd.s32 %v516, 16
    %v519 = vadd.s32 %v516, 24
    %v520 = vadd.s32 %v516, 32
    %v521 = vadd.s32 %v516, 40
    %v522 = vadd.s32 %v516, 48
    %v523 = vadd.s32 %v516, 56
    %v524 = vadd.s32 %v516, 64
    %v525 = vadd.s32 %v516, 72
    %v526 = vadd.s32 %v516, 80
    %v527 = vadd.s32 %v516, 88
    %v528 = vadd.s32 %v516, 96
    %v529 = vadd.s32 %v516, 104
    %v530 = vadd.s32 %v516, 112
    %v531 = vadd.s32 %v516, 120
    %v532 = vadd.s32 %v516, 128
    %v533 = vlaneseq
    %v534 = vand.u32 %v533, 127
    %s535 = smul.u32 0, 136
    %v536 = vstv %s535
    %v537 = vadd.s32 %v536, %v516
    %v538 = vadd.s32 %v536, %v517
    %v539 = vadd.s32 %v536, %v518
    %v540 = vadd.s32 %v536, %v519
    %v541 = vadd.s32 %v536, %v520
    %v542 = vadd.s32 %v536, %v521
    %v543 = vadd.s32 %v536, %v522
    %v544 = vadd.s32 %v536, %v523
    %v545 = vadd.s32 %v536, %v524
    %v546 = vadd.s32 %v536, %v525
    %v547 = vadd.s32 %v536, %v526
    %v548 = vadd.s32 %v536, %v527
    %v549 = vadd.s32 %v536, %v528
    %v550 = vadd.s32 %v536, %v529
    %v551 = vadd.s32 %v536, %v530
    %v552 = vadd.s32 %v536, %v531
    %v553 = vadd.s32 %v536, %v532
    %v554 = vmul.u32 %v537, 128
    %v555 = vmul.u32 %v538, 128
    %v556 = vmul.u32 %v539, 128
    %v557 = vmul.u32 %v540, 128
    %v558 = vmul.u32 %v541, 128
    %v559 = vmul.u32 %v542, 128
    %v560 = vmul.u32 %v543, 128
    %v561 = vmul.u32 %v544, 128
    %v562 = vmul.u32 %v545, 128
    %v563 = vmul.u32 %v546, 128
    %v564 = vmul.u32 %v547, 128
    %v565 = vmul.u32 %v548, 128
    %v566 = vmul.u32 %v549, 128
    %v567 = vmul.u32 %v550, 128
    %v568 = vmul.u32 %v551, 128
    %v569 = vmul.u32 %v552, 128
    %v570 = vmul.u32 %v553, 128
    %v571 = vadd.s32 %v554, %v534
    %v572 = vadd.s32 %v555, %v534
    %v573 = vadd.s32 %v556, %v534
    %v574 = vadd.s32 %v557, %v534
    %v575 = vadd.s32 %v558, %v534
    %v576 = vadd.s32 %v559, %v534
    %v577 = vadd.s32 %v560, %v534
    %v578 = vadd.s32 %v561, %v534
    %v579 = vadd.s32 %v562, %v534
    %v580 = vadd.s32 %v563, %v534
    %v581 = vadd.s32 %v564, %v534
    %v582 = vadd.s32 %v565, %v534
    %v583 = vadd.s32 %v566, %v534
    %v584 = vadd.s32 %v567, %v534
    %v585 = vadd.s32 %v568, %v534
    %v586 = vadd.s32 %v569, %v534
    %v587 = vadd.s32 %v570, %v534
    %vm588 = vcmp.lt.s32.totalorder %v571, 68
    %vm589 = vcmp.lt.s32.totalorder %v572, 68
    %vm590 = vcmp.lt.s32.totalorder %v573, 68
    %vm591 = vcmp.lt.s32.totalorder %v574, 68
    %vm592 = vcmp.lt.s32.totalorder %v575, 68
    %vm593 = vcmp.lt.s32.totalorder %v576, 68
    %vm594 = vcmp.lt.s32.totalorder %v577, 68
    %vm595 = vcmp.lt.s32.totalorder %v578, 68
    %vm596 = vcmp.lt.s32.totalorder %v579, 68
    %vm597 = vcmp.lt.s32.totalorder %v580, 68
    %vm598 = vcmp.lt.s32.totalorder %v581, 68
    %vm599 = vcmp.lt.s32.totalorder %v582, 68
    %vm600 = vcmp.lt.s32.totalorder %v583, 68
    %vm601 = vcmp.lt.s32.totalorder %v584, 68
    %vm602 = vcmp.lt.s32.totalorder %v585, 68
    %vm603 = vcmp.lt.s32.totalorder %v586, 68
    %vm604 = vcmp.lt.s32.totalorder %v587, 68
    %v605 = vsel %vm588, %v498, 0.0
    %v606 = vsel %vm589, %v499, 0.0
    %v607 = vsel %vm590, %v500, 0.0
    %v608 = vsel %vm591, %v501, 0.0
    %v609 = vsel %vm592, %v502, 0.0
    %v610 = vsel %vm593, %v503, 0.0
    %v611 = vsel %vm594, %v504, 0.0
    %v612 = vsel %vm595, %v505, 0.0
    %v613 = vsel %vm596, %v506, 0.0
    %v614 = vsel %vm597, %v507, 0.0
    %v615 = vsel %vm598, %v508, 0.0
    %v616 = vsel %vm599, %v509, 0.0
    %v617 = vsel %vm600, %v510, 0.0
    %v618 = vsel %vm601, %v511, 0.0
    %v619 = vsel %vm602, %v512, 0.0
    %v620 = vsel %vm603, %v513, 0.0
    %v621 = vsel %vm604, %v514, 0.0
    %v622 = vadd.f32 %v605, %v606
    %v623 = vadd.f32 %v622, %v607
    %v624 = vadd.f32 %v623, %v608
    %v625 = vadd.f32 %v624, %v609
    %v626 = vadd.f32 %v625, %v610
    %v627 = vadd.f32 %v626, %v611
    %v628 = vadd.f32 %v627, %v612
    %v629 = vadd.f32 %v628, %v613
    %v630 = vadd.f32 %v629, %v614
    %v631 = vadd.f32 %v630, %v615
    %v632 = vadd.f32 %v631, %v616
    %v633 = vadd.f32 %v632, %v617
    %v634 = vadd.f32 %v633, %v618
    %v635 = vadd.f32 %v634, %v619
    %v636 = vadd.f32 %v635, %v620
    %v637 = vadd.f32 %v636, %v621
    %638 = vst [vmem:[#allocation8] sm:$0xff] %v637
    // Predicated region
    $region26: #{tpu_custom_call.1} parent=1 // pred_check
      _
    $region27: #{tpu_custom_call.1} parent=1 // pred_check_branch
      %640 = sbr.rel (0) target = $region29
    $region28: #{tpu_custom_call.1} parent=1 // pred_region
      %s642 = ssub.s32 128, 128
      %643 = vsyncadd [#allocation4], %s642
      %s645 = sshll.u32 [#allocation8], 4
      %s646 = int_to_ptr.vmem [resolvable:$true] %s645
      %648 = dma.vmem_to_hbm [thread:$0]  %s646, 128, %s3, [#allocation4]
    $region29: #{tpu_custom_call.1} parent=1 // pred_fallthru
      _
    // Predicated region
    $region30: #{tpu_custom_call.1} parent=1 // pred_check
      _
    $region31: #{tpu_custom_call.1} parent=1 // pred_check_branch
      %650 = sbr.rel (0) target = $region33
    $region32: #{tpu_custom_call.1} parent=1 // pred_region
      %651 = dma.done [#allocation4], 128
    $region33: #{tpu_custom_call.1} parent=1 // pred_fallthru
      _
    %652 = vsyncpa [#allocation3], 1
    %653 = vsyncpa [#allocation6], 1
    %654 = vsyncpa [#allocation4], 1

</llo_original>
